<compile_context>
chip_gen: v7x
topology: tpu7x:2x2x1
jax: 0.10.0
libtpu: 0.0.40
codegen_flags: <defaults>
</compile_context>

<pallas_src>
import functools

import jax
import jax.numpy as jnp
from jax.experimental import pallas as pl
from jax.experimental.pallas import tpu as pltpu

FX_DTYPE = jnp.int32
FX_ONE = 1 << 10

_LANE_CHOICES = (1024, 512, 256, 128)
_RAGGED_LANE = 512  # wide lane even when padding is unavoidable


def fx_from_fp(x):
    """JAX equivalent of zeronn.fx_from_fp for tensors / scalars."""
    if isinstance(x, (int, float)):
        return int(x * FX_ONE)
    return (jnp.asarray(x) * FX_ONE).astype(FX_DTYPE)


def _round_up(x, m):
    return (x + m - 1) // m * m


def _target_block_bytes():
    """Per-generation block size for this mem-bound elementwise pass."""
    try:
        kind = jax.devices()[0].device_kind.lower()
    except Exception:  # pragma: no cover - defensive
        return 2 << 20
    if "v7" in kind or "7x" in kind:
        return 8 << 20  # v7x: fast HBM, 64 MiB VMEM -> 4*8 MiB = 32 MiB OK
    if "v6" in kind or "6e" in kind:
        return 4 << 20  # v6e: 32 MiB default scoped VMEM, 16 MiB used
    return 2 << 20      # v5e / unknown: past the pipeline-overhead knee


def _choose_layout(n, target_block_bytes):
    """Pick (lane, tile_rows, rows, padded_n) for a flat length-n int32 buffer."""
    lane = None
    for cand in _LANE_CHOICES:
        if n % cand == 0:
            lane = cand
            break
    if lane is None:
        lane = _RAGGED_LANE          # pad is unavoidable; keep lanes dense
    padded_n = _round_up(n, lane)    # pad <= lane - 1 elements (<= 2 KiB)
    rows = padded_n // lane

    if rows <= 8:
        # Tiny input: single full-extent block (allowed by the (8,128) rule).
        return lane, rows, rows, padded_n

    tile_cap = max(8, (target_block_bytes // (lane * 4)) // 8 * 8)
    # Guarantee >= 2 grid steps (megacore sharding + prefetch/writeback overlap).
    tile_cap = min(tile_cap, _round_up(-(-rows // 2), 8))
    tile_rows = max(8, min(tile_cap, _round_up(rows, 8)))
    return lane, tile_rows, rows, padded_n


class Module:
    """Base module: forward is the identity (matches zeronn.Module.forward)."""

    def __init__(self):
        self.parameters = []

    def forward(self, x, is_t):
        return x

    def apply(self, x_val, is_t):
        # In-kernel dispatch: defaults to forward() so subclasses that follow
        # the zeronn convention (override forward only) are honored in-kernel.
        return self.forward(x_val, is_t)

    def __call__(self, x, is_t):
        return self.forward(x, is_t)


def _is_identity_layer(layer):
    """True iff the layer's in-kernel behavior is provably the identity."""
    if isinstance(layer, Sequence):
        return all(_is_identity_layer(l) for l in layer.layers)
    cls = type(layer)
    return (getattr(cls, "apply", None) is Module.apply
            and getattr(cls, "forward", None) is Module.forward)


class Sequence(Module):
    """zeronn.Sequence: applies its layers in order, fused into one kernel."""

    def __init__(self, *layers):
        super().__init__()
        self.layers = layers

    def apply(self, x_val, is_t):
        # Unrolled at trace time inside the Pallas kernel body.
        for layer in self.layers:
            x_val = layer.apply(x_val, is_t)
        return x_val

    def _kernel(self, is_t, x_ref, o_ref):
        o_ref[...] = self.apply(x_ref[...], is_t)

    def forward(self, x, is_t, force_kernel=False):
        if not isinstance(is_t, (bool, int)):
            raise TypeError(
                "is_t must be a static Python bool; it selects layer code "
                "paths at trace time and cannot be a traced value.")

        # Fast path: the composed chain is the identity -> no HBM traffic.
        if not force_kernel and _is_identity_layer(self):
            return x

        orig_shape = x.shape
        flat = jnp.asarray(x, FX_DTYPE).reshape(-1)
        n = flat.shape[0]

        target_block_bytes = _target_block_bytes()
        lane, tile_rows, rows, padded_n = _choose_layout(n, target_block_bytes)

        pad = padded_n - n
        if pad:
            flat = jnp.pad(flat, (0, pad))
        x2 = flat.reshape(rows, lane)

        block_bytes = tile_rows * lane * 4
        # Double-buffered input + output blocks + headroom (<= ~40 MiB on v7x).
        vmem_limit = int(4 * block_bytes + (8 << 20))

        # Alias in->out only when x2 is a fresh buffer (ragged pad path);
        # aliasing a non-donated caller array would force a defensive copy.
        aliases = {0: 0} if pad else {}

        out2 = pl.pallas_call(
            functools.partial(self._kernel, bool(is_t)),
            out_shape=jax.ShapeDtypeStruct((rows, lane), FX_DTYPE),
            grid_spec=pltpu.PrefetchScalarGridSpec(
                num_scalar_prefetch=0,
                grid=(pl.cdiv(rows, tile_rows),),
                in_specs=[pl.BlockSpec((tile_rows, lane), lambda i: (i, 0))],
                out_specs=pl.BlockSpec((tile_rows, lane), lambda i: (i, 0)),
            ),
            input_output_aliases=aliases,
            compiler_params=pltpu.CompilerParams(
                dimension_semantics=("parallel",),
                vmem_limit_bytes=vmem_limit,
            ),
        )(x2)

        out_flat = out2.reshape(-1)
        if pad:
            out_flat = out_flat[:n]
        return out_flat.reshape(orig_shape)

    def __call__(self, x, is_t):
        return self.forward(x, is_t)


class _Double(Module):
    """Test-only elementwise layer overriding forward() (zeronn convention)."""

    def forward(self, x, is_t):
        return x + x


if __name__ == "__main__":
    key = jax.random.PRNGKey(0)
    # Small NCHW input consistent with the fx framework: batch=2, C=4, H=W=16.
    x_fp = jax.random.normal(key, (2, 4, 16, 16), dtype=jnp.float32)
    x_fx = fx_from_fp(x_fp)  # int32 fixed-point tensor

    model = Sequence(Module(), Module(), Module())

    # 1) Fast path: identity chain is short-circuited (no kernel launch).
    y_fast = jax.block_until_ready(model(x_fx, is_t=False))

    # 2) Kernel path: force the fused Pallas kernel to run the same chain.
    y_kern = jax.block_until_ready(
        model.forward(x_fx, is_t=False, force_kernel=True))

    # 3) Ragged path: non-128-divisible shape exercises lane-pad + out slice.
    x_odd = fx_from_fp(jax.random.normal(jax.random.PRNGKey(1), (3, 5, 7, 11)))
    y_odd = jax.block_until_ready(
        model.forward(x_odd, is_t=False, force_kernel=True))

    # 4) Multi-block grid with a partial (masked) final block, no padding.
    x_big = fx_from_fp(jax.random.normal(jax.random.PRNGKey(2), (5, 4, 32, 32)))
    y_big = jax.block_until_ready(
        model.forward(x_big, is_t=False, force_kernel=True))

    # 5) Non-identity chain: layer overriding forward() is honored in-kernel.
    model2 = Sequence(Module(), _Double(), Module())
    y_dbl = jax.block_until_ready(model2(x_fx, is_t=False))

    assert y_fast.shape == x_fx.shape and y_fast.dtype == FX_DTYPE
    assert y_kern.shape == x_fx.shape and y_kern.dtype == FX_DTYPE
    assert y_odd.shape == x_odd.shape and y_odd.dtype == FX_DTYPE
    assert y_big.shape == x_big.shape and y_big.dtype == FX_DTYPE
    assert bool(jnp.all(y_fast == x_fx))
    assert bool(jnp.all(y_kern == x_fx))
    assert bool(jnp.all(y_odd == x_odd))
    assert bool(jnp.all(y_big == x_big))
    assert bool(jnp.all(y_dbl == x_fx * 2))

    print("KERNEL_OK")
</pallas_src>

<mosaic_0001>
module attributes {stable_mosaic.version = 11 : i64} {
  func.func @_kernel(%arg0: i32, %arg1: memref<2x1024xi32, #tpu.memory_space<vmem>>, %arg2: memref<2x1024xi32, #tpu.memory_space<vmem>>) attributes {dimension_semantics = [#tpu.dimension_semantics<parallel>], iteration_bounds = array<i64: 1>, scalar_prefetch = 0 : i64, scratch_operands = 0 : i64, tpu.core_type = #tpu.core_type<tc>, window_params = [{transform_indices = @transform_0, window_bounds = array<i64: 2, 1024>}, {transform_indices = @transform_1, window_bounds = array<i64: 2, 1024>}]} {
    %c0 = arith.constant 0 : index
    %c0_0 = arith.constant 0 : index
    %0 = vector.load %arg1[%c0, %c0_0] : memref<2x1024xi32, #tpu.memory_space<vmem>>, vector<2x1024xi32>
    %c0_1 = arith.constant 0 : index
    %c0_2 = arith.constant 0 : index
    %1 = vector.load %arg2[%c0_1, %c0_2] : memref<2x1024xi32, #tpu.memory_space<vmem>>, vector<2x1024xi32>
    tpu.vector_store %arg2[%c0_1, %c0_2], %0 {strides = array<i32>} : memref<2x1024xi32, #tpu.memory_space<vmem>>, vector<2x1024xi32>,
    return
  }
  func.func @transform_0(%arg0: i32) -> (i32, i32) {
    %c0_i32 = arith.constant 0 : i32
    %c0_i32_0 = arith.constant 0 : i32
    return %arg0, %c0_i32 : i32, i32
  }
  func.func @transform_1(%arg0: i32) -> (i32, i32) {
    %c0_i32 = arith.constant 0 : i32
    %c0_i32_0 = arith.constant 0 : i32
    return %arg0, %c0_i32 : i32, i32
  }
}

</mosaic_0001>

<llo_original>
// kernel: tpu_custom_call.1
$region0: #{tpu_custom_call.1}
  #allocation0 [shape = 'u32[]', space=smem, size = 0x4, offset = 0x4, fixed_abs, tag = 'smem constant byte address 0x4 - core index']
  #allocation1 [shape = 'u32[144,128]{1,0:T(1,128)}', space=vmem, size = 0x12000, scoped, tag = 'internal scratch']
  %s0 = inlined_call_operand.hbm [shape: s32[2,1024], index: 0, kind: input, shape index: {}]
  %s1 = inlined_call_operand.hbm [shape: s32[2,1024], index: 1, kind: output, shape index: {}]
  %s2 = sld [smem:[#allocation0]]
  $region18: #{tpu_custom_call.1} parent=0
    _
  %s4 = ssub.s32 1, %s2
  %s5 = scalar_select 0, %s4, %s2
  $region1: #{tpu_custom_call.1} parent=0
    #allocation2 [shape = 'u8[8192]{0}', space=vmem, size = 0x2000, scoped, tag = 'input window, operand 0, single buffered']
    #allocation3 [shape = 's32[1]{0}', space=sflag, size = 0x4, scoped, tag = 'scoped memory for tpu_custom_call.1']
    #allocation4 [shape = 's32[1]{0}', space=sflag, size = 0x4, scoped, tag = 'scoped memory for tpu_custom_call.1']
    #allocation5 [shape = 'u8[8192]{0}', space=vmem, size = 0x2000, scoped, tag = 'output window, operand 0, single buffered']
    %6 = vsyncpa [#allocation3], 0
    %7 = vsyncpa [#allocation4], 0
    // Predicated region
    $region2: #{tpu_custom_call.1} parent=1 // pred_check
      _
    $region3: #{tpu_custom_call.1} parent=1 // pred_check_branch
      %9 = sbr.rel (0) target = $region5
    $region4: #{tpu_custom_call.1} parent=1 // pred_region
      %s11 = ssub.s32 256, 256
      %12 = vsyncadd [#allocation3], %s11
      %s14 = sshll.u32 [#allocation2], 4
      %s15 = int_to_ptr.vmem [resolvable:$true] %s14
      %17 = dma.hbm_to_vmem [thread:$0]  %s0, 256, %s15, [#allocation3]
    $region5: #{tpu_custom_call.1} parent=1 // pred_fallthru
      _
    // Predicated region
    $region6: #{tpu_custom_call.1} parent=1 // pred_check
      _
    $region7: #{tpu_custom_call.1} parent=1 // pred_check_branch
      %19 = sbr.rel (0) target = $region9
    $region8: #{tpu_custom_call.1} parent=1 // pred_region
      %20 = dma.done [#allocation3], 256
    $region9: #{tpu_custom_call.1} parent=1 // pred_fallthru
      _
    %v21 = vld [vmem:[#allocation2] sm:$0xff]
    %v22 = vld [vmem:[#allocation2 + $0x8] sm:$0xff]
    %23 = vst [vmem:[#allocation5] sm:$0xff] %v21
    %24 = vst [vmem:[#allocation5 + $0x8] sm:$0xff] %v22
    // Predicated region
    $region10: #{tpu_custom_call.1} parent=1 // pred_check
      _
    $region11: #{tpu_custom_call.1} parent=1 // pred_check_branch
      %26 = sbr.rel (0) target = $region13
    $region12: #{tpu_custom_call.1} parent=1 // pred_region
      %s28 = ssub.s32 256, 256
      %29 = vsyncadd [#allocation4], %s28
      %s31 = sshll.u32 [#allocation5], 4
      %s32 = int_to_ptr.vmem [resolvable:$true] %s31
      %34 = dma.vmem_to_hbm [thread:$0]  %s32, 256, %s1, [#allocation4]
    $region13: #{tpu_custom_call.1} parent=1 // pred_fallthru
      _
    // Predicated region
    $region14: #{tpu_custom_call.1} parent=1 // pred_check
      _
    $region15: #{tpu_custom_call.1} parent=1 // pred_check_branch
      %36 = sbr.rel (0) target = $region17
    $region16: #{tpu_custom_call.1} parent=1 // pred_region
      %37 = dma.done [#allocation4], 256
    $region17: #{tpu_custom_call.1} parent=1 // pred_fallthru
      _
    %38 = vsyncpa [#allocation3], 1
    %39 = vsyncpa [#allocation4], 1

</llo_original>
